<compile_context>
chip_gen: v7x
topology: tpu7x:2x2x1
jax: 0.10.0
libtpu: 0.0.40
codegen_flags: <defaults>
</compile_context>

<pallas_src>
import jax
import jax.numpy as jnp
from jax.experimental import pallas as pl
from jax.experimental.pallas import tpu as pltpu

LANE = 128
SUBLANE = 8


def _round_up(v, m):
    return ((v + m - 1) // m) * m


def _pick_tile(n, target, align):
    """Largest multiple of `align` that is <= target and divides n.
    `n` must itself be a multiple of `align` (guaranteed by wrapper padding)."""
    assert n % align == 0
    t = min(target, n)
    t -= t % align
    t = max(t, align)
    while n % t != 0:
        t -= align
    return t


def _xw_kernel(x_ref, w_ref, o_ref):
    # XW row-tile = X_tile @ W_pad (tiny matmul). Emitted in bf16 so stage 2
    # keeps / streams a half-width operand with no per-step cast.
    o_ref[...] = jnp.dot(x_ref[...], w_ref[...],
                         preferred_element_type=jnp.float32).astype(o_ref.dtype)


def _gcn_kernel_resident(a_ref, xw_ref, b_ref, invdeg_ref, o_ref):
    """Stage 2 with XW fully VMEM-resident (bf16, [n_pad, 128])."""
    i = pl.program_id(0)
    k = pl.program_id(1)
    tm = o_ref.shape[0]
    tk = a_ref.shape[1]

    @pl.when(k == 0)
    def _init():
        # Self-loop residual + bias folded into the output-block init.
        row0 = pl.multiple_of(i * tm, tm)
        o_ref[...] = xw_ref[pl.ds(row0, tm), :].astype(jnp.float32) + b_ref[...]

    # A tile cast to bf16 in-kernel (exact for 0/1 adjacency) @ XW k-slice.
    col0 = pl.multiple_of(k * tk, tk)
    o_ref[...] += jnp.dot(a_ref[...].astype(jnp.bfloat16),
                          xw_ref[pl.ds(col0, tk), :],
                          preferred_element_type=jnp.float32)

    @pl.when(k == pl.num_programs(1) - 1)
    def _fin():
        o_ref[...] = jnp.tanh(o_ref[...] * invdeg_ref[...])


def _gcn_kernel_stream(a_ref, xw_k_ref, xw_i_ref, b_ref, invdeg_ref, o_ref):
    """Stage-2 fallback for very large graphs: XW (bf16) streamed per tile."""
    k = pl.program_id(1)

    @pl.when(k == 0)
    def _init():
        o_ref[...] = xw_i_ref[...].astype(jnp.float32) + b_ref[...]

    o_ref[...] += jnp.dot(a_ref[...].astype(jnp.bfloat16),
                          xw_k_ref[...],
                          preferred_element_type=jnp.float32)

    @pl.when(k == pl.num_programs(1) - 1)
    def _fin():
        o_ref[...] = jnp.tanh(o_ref[...] * invdeg_ref[...])


def gcn_dgcnn_forward(x, adjacency, degree, w, b, *,
                      tm=512, tk=2048, xw_resident_bytes=4 << 20):
    """x: [N, D_in], adjacency: [N, N] (0/1), degree: [N, 1] or [N],
       w: [D_in, D_lat] (pre-transposed nn.Linear weight, i.e. W^T of torch),
       b: [1, D_lat] or [D_lat]."""
    n, d_in = x.shape
    assert adjacency.shape == (n, n), "adjacency must be [N, N]"
    assert w.shape[0] == d_in, (
        "pass the pre-transposed nn.Linear weight: w.shape == (input_dim, latent_dim)")
    d_lat = w.shape[1]
    d_pad = _round_up(d_lat, LANE)          # keep at 128: kernel is HBM-bound
    n_pad = _round_up(n, LANE)              # avoids degenerate full-extent tiles

    # Lane-dense Linear params (zero padding is exact: padded cols stay 0).
    w_pad = jnp.zeros((d_in, d_pad), jnp.float32).at[:, :d_lat].set(
        w.astype(jnp.float32))
    b_pad = jnp.zeros((1, d_pad), jnp.float32).at[:, :d_lat].set(
        jnp.asarray(b, jnp.float32).reshape(1, d_lat))

    # Precomputed reciprocal degree; padded rows get 1.0 (no inf/NaN, sliced off).
    inv_deg = jnp.ones((n_pad, 1), jnp.float32).at[:n, :].set(
        1.0 / jnp.asarray(degree, jnp.float32).reshape(n, 1))

    x_p = x.astype(jnp.float32)
    a_p = adjacency                          # streamed in caller dtype; cast per-tile in-kernel
    if n_pad != n:
        pad = n_pad - n
        x_p = jnp.pad(x_p, ((0, pad), (0, 0)))
        a_p = jnp.pad(a_p, ((0, pad), (0, pad)))

    # Tile selection: big A tiles, but keep >=2 row blocks for the v7x 2-TC split.
    tm_cap = max(n_pad // 2, SUBLANE)
    tm = _pick_tile(n_pad, min(tm, tm_cap), SUBLANE)
    tk = _pick_tile(n_pad, tk, LANE)

    stage2_params = pltpu.CompilerParams(
        dimension_semantics=("parallel", "arbitrary"),
        vmem_limit_bytes=32 * 1024 * 1024)   # v5e default is only 16 MiB

    # ---- Stage 1: XW = X @ W_pad (bf16 output) ----
    tm1 = _pick_tile(n_pad, 512, SUBLANE)
    xw = pl.pallas_call(
        _xw_kernel,
        out_shape=jax.ShapeDtypeStruct((n_pad, d_pad), jnp.bfloat16),
        grid=(n_pad // tm1,),
        in_specs=[
            pl.BlockSpec((tm1, d_in), lambda i: (i, 0)),
            pl.BlockSpec((d_in, d_pad), lambda i: (0, 0)),
        ],
        out_specs=pl.BlockSpec((tm1, d_pad), lambda i: (i, 0)),
        compiler_params=pltpu.CompilerParams(dimension_semantics=("parallel",)),
    )(x_p, w_pad)

    # ---- Stage 2: out = tanh((A @ XW + XW + b) * inv_deg), A streamed ----
    grid = (n_pad // tm, n_pad // tk)
    if n_pad * d_pad * 2 <= xw_resident_bytes:
        out_pad = pl.pallas_call(
            _gcn_kernel_resident,
            out_shape=jax.ShapeDtypeStruct((n_pad, d_pad), jnp.float32),
            grid=grid,
            in_specs=[
                pl.BlockSpec((tm, tk), lambda i, k: (i, k)),        # A tile (streamed)
                pl.BlockSpec((n_pad, d_pad), lambda i, k: (0, 0)),  # XW (resident bf16)
                pl.BlockSpec((1, d_pad), lambda i, k: (0, 0)),      # bias row
                pl.BlockSpec((tm, 1), lambda i, k: (i, 0)),         # 1/degree column
            ],
            out_specs=pl.BlockSpec((tm, d_pad), lambda i, k: (i, 0)),
            compiler_params=stage2_params,
        )(a_p, xw, b_pad, inv_deg)
    else:
        out_pad = pl.pallas_call(
            _gcn_kernel_stream,
            out_shape=jax.ShapeDtypeStruct((n_pad, d_pad), jnp.float32),
            grid=grid,
            in_specs=[
                pl.BlockSpec((tm, tk), lambda i, k: (i, k)),        # A tile
                pl.BlockSpec((tk, d_pad), lambda i, k: (k, 0)),     # XW k-slice (bf16)
                pl.BlockSpec((tm, d_pad), lambda i, k: (i, 0)),     # XW residual tile
                pl.BlockSpec((1, d_pad), lambda i, k: (0, 0)),      # bias
                pl.BlockSpec((tm, 1), lambda i, k: (i, 0)),         # 1/degree
            ],
            out_specs=pl.BlockSpec((tm, d_pad), lambda i, k: (i, 0)),
            compiler_params=stage2_params,
        )(a_p, xw, xw, b_pad, inv_deg)

    # Slice off the row and lane padding. Dropout (p=0.0) is identity.
    return out_pad[:n, :d_lat]


def reference_forward(x, adjacency, degree, w, b):
    pool = adjacency @ x + x
    lin = pool @ w + b
    return jnp.tanh(lin / degree)


if __name__ == "__main__":
    key = jax.random.PRNGKey(0)
    k_x, k_a, k_w, k_b = jax.random.split(key, 4)

    N = 64           # number of graph nodes
    INPUT_DIM = 32
    LATENT_DIM = 16

    # Node features
    x = jax.random.normal(k_x, (N, INPUT_DIM), dtype=jnp.float32)

    # Random symmetric 0/1 adjacency (no self loops; self loop handled by +x)
    a_raw = (jax.random.uniform(k_a, (N, N)) < 0.1).astype(jnp.float32)
    adjacency = jnp.maximum(a_raw, a_raw.T) * (1.0 - jnp.eye(N, dtype=jnp.float32))

    # DGCNN degree: row-sum of (A + I)
    degree = jnp.sum(adjacency, axis=1, keepdims=True) + 1.0   # [N, 1]

    # nn.Linear(input_dim, latent_dim) params (pass W^T of the torch module)
    bound = 1.0 / (INPUT_DIM ** 0.5)
    w = jax.random.uniform(k_w, (INPUT_DIM, LATENT_DIM),
                           minval=-bound, maxval=bound, dtype=jnp.float32)
    b = jax.random.uniform(k_b, (1, LATENT_DIM),
                           minval=-bound, maxval=bound, dtype=jnp.float32)

    out = gcn_dgcnn_forward(x, adjacency, degree, w, b)
    out = jax.block_until_ready(out)

    ref = reference_forward(x, adjacency, degree, w, b)
    assert out.shape == (N, LATENT_DIM)
    # bf16 XW (contraction + residual) introduces ~1e-3-level differences.
    assert jnp.allclose(out, ref, atol=1e-2, rtol=1e-2), float(
        jnp.max(jnp.abs(out - ref)))

    print("KERNEL_OK")
</pallas_src>

<mosaic_0001>
module attributes {stable_mosaic.version = 11 : i64} {
  func.func @_xw_kernel(%arg0: i32, %arg1: memref<128x32xf32, #tpu.memory_space<vmem>>, %arg2: memref<32x128xf32, #tpu.memory_space<vmem>>, %arg3: memref<128x128xbf16, #tpu.memory_space<vmem>>) attributes {dimension_semantics = [#tpu.dimension_semantics<parallel>], iteration_bounds = array<i64: 1>, scalar_prefetch = 0 : i64, scratch_operands = 0 : i64, tpu.core_type = #tpu.core_type<tc>, window_params = [{transform_indices = @transform_0, window_bounds = array<i64: 128, 32>}, {pipeline_mode = #tpu.pipeline_mode<synchronous>, transform_indices = @transform_1, window_bounds = array<i64: 32, 128>}, {transform_indices = @transform_2, window_bounds = array<i64: 128, 128>}]} {
    %c0 = arith.constant 0 : index
    %c0_0 = arith.constant 0 : index
    %0 = vector.load %arg1[%c0, %c0_0] : memref<128x32xf32, #tpu.memory_space<vmem>>, vector<128x32xf32>
    %c0_1 = arith.constant 0 : index
    %c0_2 = arith.constant 0 : index
    %1 = vector.load %arg2[%c0_1, %c0_2] : memref<32x128xf32, #tpu.memory_space<vmem>>, vector<32x128xf32>
    %cst = arith.constant dense<0.000000e+00> : vector<128x128xf32>
    %2 = tpu.matmul %0, %1, %cst {dimension_numbers = #tpu.dot_dimension_numbers<[1], [0], [0], [1], [0, 0, 1, 1], [], []>} : vector<128x32xf32>, vector<32x128xf32>, vector<128x128xf32> -> vector<128x128xf32>
    %3 = arith.truncf %2 : vector<128x128xf32> to vector<128x128xbf16>
    %c0_3 = arith.constant 0 : index
    %c0_4 = arith.constant 0 : index
    %4 = vector.load %arg3[%c0_3, %c0_4] : memref<128x128xbf16, #tpu.memory_space<vmem>>, vector<128x128xbf16>
    tpu.vector_store %arg3[%c0_3, %c0_4], %3 {strides = array<i32>} : memref<128x128xbf16, #tpu.memory_space<vmem>>, vector<128x128xbf16>,
    return
  }
  func.func @transform_0(%arg0: i32) -> (i32, i32) {
    %c0_i32 = arith.constant 0 : i32
    %c0_i32_0 = arith.constant 0 : i32
    return %arg0, %c0_i32 : i32, i32
  }
  func.func @transform_1(%arg0: i32) -> (i32, i32) {
    %c0_i32 = arith.constant 0 : i32
    %c0_i32_0 = arith.constant 0 : i32
    %c0_i32_1 = arith.constant 0 : i32
    return %c0_i32, %c0_i32_0 : i32, i32
  }
  func.func @transform_2(%arg0: i32) -> (i32, i32) {
    %c0_i32 = arith.constant 0 : i32
    %c0_i32_0 = arith.constant 0 : i32
    return %arg0, %c0_i32 : i32, i32
  }
}

</mosaic_0001>

<llo_original>
// kernel: tpu_custom_call.1
$region0: #{tpu_custom_call.1}
  #allocation0 [shape = 'u32[]', space=smem, size = 0x4, offset = 0x4, fixed_abs, tag = 'smem constant byte address 0x4 - core index']
  #allocation1 [shape = 'u32[144,128]{1,0:T(1,128)}', space=vmem, size = 0x12000, scoped, tag = 'internal scratch']
  %s0 = inlined_call_operand.vmem [shape: f32[128,32], index: 0, kind: input, shape index: {}]
  %s1 = inlined_call_operand.vmem [shape: f32[32,128], index: 1, kind: input, shape index: {}]
  %s2 = inlined_call_operand.hbm [shape: bf16[128,128], index: 2, kind: output, shape index: {}]
  %s3 = sld [smem:[#allocation0]]
  $region18: #{tpu_custom_call.1} parent=0
    _
  %s5 = ssub.s32 1, %s3
  %s6 = scalar_select 0, %s5, %s3
  $region1: #{tpu_custom_call.1} parent=0
    #allocation2 [shape = 'u8[32768]{0}', space=vmem, size = 0x8000, scoped, tag = 'output window, operand 0, single buffered']
    #allocation3 [shape = 's32[1]{0}', space=sflag, size = 0x4, scoped, tag = 'scoped memory for tpu_custom_call.1']
    %7 = vsyncpa [#allocation3], 0
    // Predicated region
    $region2: #{tpu_custom_call.1} parent=1 // pred_check
      _
    $region3: #{tpu_custom_call.1} parent=1 // pred_check_branch
      %9 = sbr.rel (0) target = $region5
    $region4: #{tpu_custom_call.1} parent=1 // pred_region
      _
    $region5: #{tpu_custom_call.1} parent=1 // pred_fallthru
      _
    // Predicated region
    $region6: #{tpu_custom_call.1} parent=1 // pred_check
      _
    $region7: #{tpu_custom_call.1} parent=1 // pred_check_branch
      %11 = sbr.rel (0) target = $region9
    $region8: #{tpu_custom_call.1} parent=1 // pred_region
      _
    $region9: #{tpu_custom_call.1} parent=1 // pred_fallthru
      _
    %v12 = vld [vmem:[%s0] sm:$0xff]
    %v13 = vld [vmem:[%s0 + $0x8] sm:$0xff]
    %v14 = vld [vmem:[%s0 + $0x10] sm:$0xff]
    %v15 = vld [vmem:[%s0 + $0x18] sm:$0xff]
    %v16 = vld [vmem:[%s0 + $0x20] sm:$0xff]
    %v17 = vld [vmem:[%s0 + $0x28] sm:$0xff]
    %v18 = vld [vmem:[%s0 + $0x30] sm:$0xff]
    %v19 = vld [vmem:[%s0 + $0x38] sm:$0xff]
    %v20 = vld [vmem:[%s0 + $0x40] sm:$0xff]
    %v21 = vld [vmem:[%s0 + $0x48] sm:$0xff]
    %v22 = vld [vmem:[%s0 + $0x50] sm:$0xff]
    %v23 = vld [vmem:[%s0 + $0x58] sm:$0xff]
    %v24 = vld [vmem:[%s0 + $0x60] sm:$0xff]
    %v25 = vld [vmem:[%s0 + $0x68] sm:$0xff]
    %v26 = vld [vmem:[%s0 + $0x70] sm:$0xff]
    %v27 = vld [vmem:[%s0 + $0x78] sm:$0xff]
    %v28 = vld [vmem:[%s1] sm:$0xff]
    %v29 = vld [vmem:[%s1 + $0x8] sm:$0xff]
    %v30 = vld [vmem:[%s1 + $0x10] sm:$0xff]
    %v31 = vld [vmem:[%s1 + $0x18] sm:$0xff]
    %vm32 = vcmask 261120
    %v34 = vsel %vm32, %v12, 0
    %v37 = vsel %vm32, %v13, 0
    %v40 = vsel %vm32, %v14, 0
    %v43 = vsel %vm32, %v15, 0
    %v46 = vsel %vm32, %v16, 0
    %v49 = vsel %vm32, %v17, 0
    %v52 = vsel %vm32, %v18, 0
    %v55 = vsel %vm32, %v19, 0
    %v58 = vsel %vm32, %v20, 0
    %v61 = vsel %vm32, %v21, 0
    %v64 = vsel %vm32, %v22, 0
    %v67 = vsel %vm32, %v23, 0
    %v70 = vsel %vm32, %v24, 0
    %v73 = vsel %vm32, %v25, 0
    %v76 = vsel %vm32, %v26, 0
    %v79 = vsel %vm32, %v27, 0
    %81 = vmatprep.subr.mxu0 0.0
    %82 = vmatpush1.msra.mxu0 %v28
    %83 = vmatprep.subr.mxu0 0.0
    %84 = vmatpush1.msra.mxu0 %v29
    %85 = vmatprep.subr.mxu0 0.0
    %86 = vmatpush1.msra.mxu0 %v30
    %87 = vmatprep.subr.mxu0 0.0
    %88 = vmatpush1.msra.mxu0 %v31
    %89 = vmatprep.subr.mxu0 0.0
    %90 = vmatpush1.msra.mxu0 0.0
    %91 = vmatprep.subr.mxu0 0.0
    %92 = vmatpush1.msra.mxu0 0.0
    %93 = vmatprep.subr.mxu0 0.0
    %94 = vmatpush1.msra.mxu0 0.0
    %95 = vmatprep.subr.mxu0 0.0
    %96 = vmatpush1.msra.mxu0 0.0
    %97 = vmatprep.subr.mxu0 0.0
    %98 = vmatpush1.msra.mxu0 0.0
    %99 = vmatprep.subr.mxu0 0.0
    %100 = vmatpush1.msra.mxu0 0.0
    %101 = vmatprep.subr.mxu0 0.0
    %102 = vmatpush1.msra.mxu0 0.0
    %103 = vmatprep.subr.mxu0 0.0
    %104 = vmatpush1.msra.mxu0 0.0
    %105 = vmatprep.subr.mxu0 0.0
    %106 = vmatpush1.msra.mxu0 0.0
    %107 = vmatprep.subr.mxu0 0.0
    %108 = vmatpush1.msra.mxu0 0.0
    %109 = vmatprep.subr.mxu0 0.0
    %110 = vmatpush1.msra.mxu0 0.0
    %111 = vmatprep.subr.mxu0 0.0
    %112 = vmatpush1.msra.mxu0 0.0
    %113 = vmatprep.subr.mxu0 0.0
    %114 = vmatpush1.msra.mxu0 0.0
    %115 = vmatprep.subr.mxu0 0.0
    %116 = vmatpush1.msra.mxu0 0.0
    %117 = vmatprep.subr.mxu0 0.0
    %118 = vmatpush1.msra.mxu0 0.0
    %119 = vmatprep.subr.mxu0 0.0
    %120 = vmatpush1.msra.mxu0 0.0
    %121 = vmatprep.subr.mxu0 0.0
    %122 = vmatpush1.msra.mxu0 0.0
    %123 = vmatprep.subr.mxu0 0.0
    %124 = vmatpush1.msra.mxu0 0.0
    %125 = vmatprep.subr.mxu0 0.0
    %126 = vmatpush1.msra.mxu0 0.0
    %127 = vmatprep.subr.mxu0 0.0
    %128 = vmatpush1.msra.mxu0 0.0
    %129 = vmatprep.subr.mxu0 0.0
    %130 = vmatpush1.msra.mxu0 0.0
    %131 = vmatprep.subr.mxu0 0.0
    %132 = vmatpush1.msra.mxu0 0.0
    %133 = vmatprep.subr.mxu0 0.0
    %134 = vmatpush1.msra.mxu0 0.0
    %135 = vmatprep.subr.mxu0 0.0
    %136 = vmatpush1.msra.mxu0 0.0
    %137 = vmatprep.subr.mxu0 0.0
    %138 = vmatpush1.msra.mxu0 0.0
    %139 = vmatprep.subr.mxu0 0.0
    %140 = vmatpush1.msra.mxu0 0.0
    %141 = vmatprep.subr.mxu0 0.0
    %142 = vmatpush1.msra.mxu0 0.0
    %143 = vmatprep.subr.mxu0 0.0
    %144 = vmatpush1.msra.mxu0 0.0
    %145 = vmatprep.mubr.f32.mxu0 0.0
    %146 = vmatmul.mubr.f32.gmra.mrb[0].mxu0 %v34
    %v147 = vpop.f32.mrb[0].mxu0
    %v148 = vadd.f32 0.0, %v147
    %v149 = vpop.f32.mrb[0].mxu0
    %150 = vmatprep.mubr.f32.mxu0 0.0
    %151 = vmatmul.mubr.f32.gmra.mrb[0].mxu0 %v37
    %v152 = vpop.f32.mrb[0].mxu0
    %v153 = vadd.f32 0.0, %v152
    %v154 = vpop.f32.mrb[0].mxu0
    %155 = vmatprep.mubr.f32.mxu0 0.0
    %156 = vmatmul.mubr.f32.gmra.mrb[0].mxu0 %v40
    %v157 = vpop.f32.mrb[0].mxu0
    %v158 = vadd.f32 0.0, %v157
    %v159 = vpop.f32.mrb[0].mxu0
    %160 = vmatprep.mubr.f32.mxu0 0.0
    %161 = vmatmul.mubr.f32.gmra.mrb[0].mxu0 %v43
    %v162 = vpop.f32.mrb[0].mxu0
    %v163 = vadd.f32 0.0, %v162
    %v164 = vpop.f32.mrb[0].mxu0
    %165 = vmatprep.mubr.f32.mxu0 0.0
    %166 = vmatmul.mubr.f32.gmra.mrb[0].mxu0 %v46
    %v167 = vpop.f32.mrb[0].mxu0
    %v168 = vadd.f32 0.0, %v167
    %v169 = vpop.f32.mrb[0].mxu0
    %170 = vmatprep.mubr.f32.mxu0 0.0
    %171 = vmatmul.mubr.f32.gmra.mrb[0].mxu0 %v49
    %v172 = vpop.f32.mrb[0].mxu0
    %v173 = vadd.f32 0.0, %v172
    %v174 = vpop.f32.mrb[0].mxu0
    %175 = vmatprep.mubr.f32.mxu0 0.0
    %176 = vmatmul.mubr.f32.gmra.mrb[0].mxu0 %v52
    %v177 = vpop.f32.mrb[0].mxu0
    %v178 = vadd.f32 0.0, %v177
    %v179 = vpop.f32.mrb[0].mxu0
    %180 = vmatprep.mubr.f32.mxu0 0.0
    %181 = vmatmul.mubr.f32.gmra.mrb[0].mxu0 %v55
    %v182 = vpop.f32.mrb[0].mxu0
    %v183 = vadd.f32 0.0, %v182
    %v184 = vpop.f32.mrb[0].mxu0
    %185 = vmatprep.mubr.f32.mxu0 0.0
    %186 = vmatmul.mubr.f32.gmra.mrb[0].mxu0 %v58
    %v187 = vpop.f32.mrb[0].mxu0
    %v188 = vadd.f32 0.0, %v187
    %v189 = vpop.f32.mrb[0].mxu0
    %190 = vmatprep.mubr.f32.mxu0 0.0
    %191 = vmatmul.mubr.f32.gmra.mrb[0].mxu0 %v61
    %v192 = vpop.f32.mrb[0].mxu0
    %v193 = vadd.f32 0.0, %v192
    %v194 = vpop.f32.mrb[0].mxu0
    %195 = vmatprep.mubr.f32.mxu0 0.0
    %196 = vmatmul.mubr.f32.gmra.mrb[0].mxu0 %v64
    %v197 = vpop.f32.mrb[0].mxu0
    %v198 = vadd.f32 0.0, %v197
    %v199 = vpop.f32.mrb[0].mxu0
    %200 = vmatprep.mubr.f32.mxu0 0.0
    %201 = vmatmul.mubr.f32.gmra.mrb[0].mxu0 %v67
    %v202 = vpop.f32.mrb[0].mxu0
    %v203 = vadd.f32 0.0, %v202
    %v204 = vpop.f32.mrb[0].mxu0
    %205 = vmatprep.mubr.f32.mxu0 0.0
    %206 = vmatmul.mubr.f32.gmra.mrb[0].mxu0 %v70
    %v207 = vpop.f32.mrb[0].mxu0
    %v208 = vadd.f32 0.0, %v207
    %v209 = vpop.f32.mrb[0].mxu0
    %210 = vmatprep.mubr.f32.mxu0 0.0
    %211 = vmatmul.mubr.f32.gmra.mrb[0].mxu0 %v73
    %v212 = vpop.f32.mrb[0].mxu0
    %v213 = vadd.f32 0.0, %v212
    %v214 = vpop.f32.mrb[0].mxu0
    %215 = vmatprep.mubr.f32.mxu0 0.0
    %216 = vmatmul.mubr.f32.gmra.mrb[0].mxu0 %v76
    %v217 = vpop.f32.mrb[0].mxu0
    %v218 = vadd.f32 0.0, %v217
    %v219 = vpop.f32.mrb[0].mxu0
    %220 = vmatprep.mubr.f32.mxu0 0.0
    %221 = vmatmul.mubr.f32.gmra.mrb[0].mxu0 %v79
    %v222 = vpop.f32.mrb[0].mxu0
    %v223 = vadd.f32 0.0, %v222
    %v224 = vpop.f32.mrb[0].mxu0
    %225 = vdwg.mxu0
    %v226 = vpack.c.bf16 %v153, %v148
    %v227 = vpack.c.bf16 %v163, %v158
    %v228 = vpack.c.bf16 %v173, %v168
    %v229 = vpack.c.bf16 %v183, %v178
    %v230 = vpack.c.bf16 %v193, %v188
    %v231 = vpack.c.bf16 %v203, %v198
    %v232 = vpack.c.bf16 %v213, %v208
    %v233 = vpack.c.bf16 %v223, %v218
    %v242 = vunpack.c.l.b16 %v226
    %v243 = vunpack.c.h.b16 %v226
    %v244 = vunpack.c.l.b16 %v227
    %v245 = vunpack.c.h.b16 %v227
    %v246 = vunpack.c.l.b16 %v228
    %v247 = vunpack.c.h.b16 %v228
    %v248 = vunpack.c.l.b16 %v229
    %v249 = vunpack.c.h.b16 %v229
    %v250 = vunpack.c.l.b16 %v230
    %v251 = vunpack.c.h.b16 %v230
    %v252 = vunpack.c.l.b16 %v231
    %v253 = vunpack.c.h.b16 %v231
    %v254 = vunpack.c.l.b16 %v232
    %v255 = vunpack.c.h.b16 %v232
    %v256 = vunpack.c.l.b16 %v233
    %v257 = vunpack.c.h.b16 %v233
    %v258 = vpack.c.b16 %v242, %v242
    %v259 = vpack.c.b16 %v243, %v243
    %v260 = vpack.c.b16 %v244, %v244
    %v261 = vpack.c.b16 %v245, %v245
    %v262 = vpack.c.b16 %v246, %v246
    %v263 = vpack.c.b16 %v247, %v247
    %v264 = vpack.c.b16 %v248, %v248
    %v265 = vpack.c.b16 %v249, %v249
    %v266 = vpack.c.b16 %v250, %v250
    %v267 = vpack.c.b16 %v251, %v251
    %v268 = vpack.c.b16 %v252, %v252
    %v269 = vpack.c.b16 %v253, %v253
    %v270 = vpack.c.b16 %v254, %v254
    %v271 = vpack.c.b16 %v255, %v255
    %v272 = vpack.c.b16 %v256, %v256
    %v273 = vpack.c.b16 %v257, %v257
    %290 = vst [vmem:[#allocation2] sm:$0xf] %v258
    %291 = vst [vmem:[#allocation2 + $0x4] sm:$0xf] %v259
    %292 = vst [vmem:[#allocation2 + $0x8] sm:$0xf] %v260
    %293 = vst [vmem:[#allocation2 + $0xc] sm:$0xf] %v261
    %294 = vst [vmem:[#allocation2 + $0x10] sm:$0xf] %v262
    %295 = vst [vmem:[#allocation2 + $0x14] sm:$0xf] %v263
    %296 = vst [vmem:[#allocation2 + $0x18] sm:$0xf] %v264
    %297 = vst [vmem:[#allocation2 + $0x1c] sm:$0xf] %v265
    %298 = vst [vmem:[#allocation2 + $0x20] sm:$0xf] %v266
    %299 = vst [vmem:[#allocation2 + $0x24] sm:$0xf] %v267
    %300 = vst [vmem:[#allocation2 + $0x28] sm:$0xf] %v268
    %301 = vst [vmem:[#allocation2 + $0x2c] sm:$0xf] %v269
    %302 = vst [vmem:[#allocation2 + $0x30] sm:$0xf] %v270
    %303 = vst [vmem:[#allocation2 + $0x34] sm:$0xf] %v271
    %304 = vst [vmem:[#allocation2 + $0x38] sm:$0xf] %v272
    %305 = vst [vmem:[#allocation2 + $0x3c] sm:$0xf] %v273
    // Predicated region
    $region10: #{tpu_custom_call.1} parent=1 // pred_check
      _
    $region11: #{tpu_custom_call.1} parent=1 // pred_check_branch
      %307 = sbr.rel (0) target = $region13
    $region12: #{tpu_custom_call.1} parent=1 // pred_region
      %s309 = ssub.s32 1024, 1024
      %310 = vsyncadd [#allocation3], %s309
      %s311 = sshll.u32 [#allocation2], 4
      %s312 = int_to_ptr.vmem [resolvable:$true] %s311
      %317 = dma.vmem_to_hbm [thread:$0]  %s312, 1024, %s2, [#allocation3], 64, 64, 4
    $region13: #{tpu_custom_call.1} parent=1 // pred_fallthru
      _
    // Predicated region
    $region14: #{tpu_custom_call.1} parent=1 // pred_check
      _
    $region15: #{tpu_custom_call.1} parent=1 // pred_check_branch
      %319 = sbr.rel (0) target = $region17
    $region16: #{tpu_custom_call.1} parent=1 // pred_region
      %320 = dma.done [#allocation3], 1024
    $region17: #{tpu_custom_call.1} parent=1 // pred_fallthru
      _
    %321 = vsyncpa [#allocation3], 1

</llo_original>
